<compile_context>
chip_gen: v7x
topology: tpu7x:2x2x1
jax: 0.10.0
libtpu: 0.0.40
codegen_flags: <defaults>
</compile_context>

<pallas_src>
import functools

import numpy as np
import jax
import jax.numpy as jnp
from jax import lax
from jax.experimental import pallas as pl
from jax.experimental.pallas import tpu as pltpu


def _round_up(x, m):
    return (x + m - 1) // m * m


def _cdiv(a, b):
    return -(-a // b)


def _conv_lerp_clamp_kernel(z_hbm, wf_ref, t_ref, out_ref, slab, sem, *,
                            lane_tile, slab_len, tap_offsets, center_off):
    """One lane tile: halo DMA -> fused tap matmul -> lerp -> clamp."""
    o = pl.program_id(0)
    j = pl.program_id(1)
    n_inner = pl.num_programs(1)
    blk = o * n_inner + j                 # flat lane-block index
    slot = j & 1

    def start_fetch(block_idx, s):
        q0 = pl.multiple_of(block_idx * lane_tile, 128)
        pltpu.make_async_copy(z_hbm.at[:, pl.ds(q0, slab_len)],
                              slab.at[s], sem.at[s]).start()

    # Prime the double-buffer at the start of each inner ("arbitrary") sweep.
    @pl.when(j == 0)
    def _():
        start_fetch(blk, 0)

    # Wait for the current tile's halo slab.
    pltpu.make_async_copy(z_hbm.at[:, pl.ds(0, slab_len)],
                          slab.at[slot], sem.at[slot]).wait()

    # Prefetch the next tile while we compute on this one.
    @pl.when(j + 1 < n_inner)
    def _():
        start_fetch(blk + 1, 1 - slot)

    buf = slab.at[slot]                   # (C, slab_len) halo slab in VMEM
    # Fused im2col slab (k*k*C, tile) built from lane-shifted views (XLU shifts,
    # zero extra HBM traffic).
    taps = jnp.concatenate(
        [buf[:, off:off + lane_tile] for off in tap_offsets], axis=0)
    conv = jnp.dot(wf_ref[...], taps, preferred_element_type=jnp.float32)

    x = buf[:, center_off:center_off + lane_tile]   # original pixels = centre tap
    t = t_ref[0]
    out_ref[...] = jnp.clip(x + (conv - x) * t, 0.0, 1.0)   # lerp + clamp


@functools.partial(jax.jit, static_argnames=("depthwise", "lane_tile", "num_parallel"))
def conv_lerp_clamp(image, weight, t, *, depthwise, lane_tile=8192, num_parallel=2):
    """Pallas hot path: conv2d(padding=(k-1)//2, groups) -> lerp -> clamp (CHW)."""
    C, H, W = image.shape
    k = weight.shape[-1]
    assert k % 2 == 1, "shape-preserving conv requires odd kernel size"
    pad = (k - 1) // 2
    Hp, Wp = H + 2 * pad, W + 2 * pad

    image = image.astype(jnp.float32)
    weight = weight.astype(jnp.float32)

    # Densify depthwise (groups == C) weights so both groupings share ONE fused matmul.
    if depthwise:
        weight = weight[:, 0][:, None] * jnp.eye(C, dtype=jnp.float32)[:, :, None, None]
    # Fused weight (C_out, k*k*C_in); K index = (kh*k + kw)*C + ci (matches tap order).
    wf = jnp.transpose(weight, (0, 2, 3, 1)).reshape(C, k * k * C)

    # Zero-padded image flattened over padded spatial coords (lane axis).
    zflat = jnp.pad(image, ((0, 0), (pad, pad), (pad, pad))).reshape(C, Hp * Wp)

    halo = (k - 1) * (Wp + 1)             # largest tap offset
    needed = H * Wp                       # flat output positions that matter
    tile = min(lane_tile, _round_up(max(128, _cdiv(needed, num_parallel)), 128))
    n_inner = _cdiv(needed, tile * num_parallel)
    n_total = num_parallel * n_inner * tile
    slab_len = _round_up(tile + halo, 128)
    # Pad so every (tile + halo) DMA window is in bounds.
    zflat = jnp.pad(zflat, ((0, 0), (0, n_total + slab_len - Hp * Wp)))

    tap_offsets = tuple(kh * Wp + kw for kh in range(k) for kw in range(k))
    center_off = pad * Wp + pad
    t_arr = jnp.asarray(t, jnp.float32).reshape(1)

    kernel = functools.partial(
        _conv_lerp_clamp_kernel, lane_tile=tile, slab_len=slab_len,
        tap_offsets=tap_offsets, center_off=center_off)

    out_index = lambda o, j: (0, o * n_inner + j)

    out_flat = pl.pallas_call(
        kernel,
        out_shape=jax.ShapeDtypeStruct((C, n_total), jnp.float32),
        grid_spec=pltpu.PrefetchScalarGridSpec(
            num_scalar_prefetch=0,
            grid=(num_parallel, n_inner),
            in_specs=[
                pl.BlockSpec(memory_space=pl.ANY),                   # padded image (HBM)
                pl.BlockSpec((C, k * k * C), lambda o, j: (0, 0)),   # weights, VMEM-resident
                pl.BlockSpec(memory_space=pltpu.MemorySpace.SMEM),   # lerp factor t
            ],
            out_specs=pl.BlockSpec((C, tile), out_index),            # lane-dense output
            scratch_shapes=[
                pltpu.VMEM((2, C, slab_len), jnp.float32),           # double-buffered halo slab
                pltpu.SemaphoreType.DMA((2,)),
            ],
        ),
        compiler_params=pltpu.CompilerParams(
            dimension_semantics=("parallel", "arbitrary"),
            vmem_limit_bytes=32 * 1024 * 1024,
        ),
    )(zflat, wf, t_arr)

    # Undo the padded-coordinate flattening: valid columns are [0, W) of each row.
    return out_flat[:, :H * Wp].reshape(C, H, Wp)[:, :, :W]


def random_convolution(image, kernel_sizes, *, depthwise=False, seed=0, **kwargs):
    """JAX/Pallas equivalent of RandomConvolution.forward for a CHW image."""
    # Kernel-size choice is a *shape* decision: draw it on the host (mirrors
    # torch's .item() host sync) so the device path stays jittable / sync-free.
    rng = np.random.default_rng(seed)
    kernel_size = int(kernel_sizes[int(rng.integers(len(kernel_sizes)))])

    key = jax.random.PRNGKey(seed)
    k_w, k_t = jax.random.split(key)
    C = image.shape[-3]
    groups = C if depthwise else 1
    # weight ~ randn(C, C//groups, k, k), normalized so each output filter sums to 1.
    weight = jax.random.normal(
        k_w, (C, C // groups, kernel_size, kernel_size), dtype=jnp.float32)
    weight = weight / jnp.sum(weight, axis=(-3, -2, -1), keepdims=True)
    t = jax.random.uniform(k_t, (), dtype=jnp.float32)

    out = conv_lerp_clamp(image, weight, t, depthwise=depthwise)
    return dict(kwargs, image=out)


def _reference(image, weight, t, *, depthwise):
    """Pure-JAX reference (lax conv) mirroring the torch semantics."""
    C = image.shape[0]
    k = weight.shape[-1]
    pad = (k - 1) // 2
    groups = C if depthwise else 1
    conv = lax.conv_general_dilated(
        image[None].astype(jnp.float32), weight.astype(jnp.float32),
        window_strides=(1, 1), padding=[(pad, pad), (pad, pad)],
        dimension_numbers=("NCHW", "OIHW", "NCHW"),
        feature_group_count=groups,
        precision=lax.Precision.HIGHEST)[0]
    return jnp.clip(image + (conv - image) * t, 0.0, 1.0)


if __name__ == "__main__":
    key = jax.random.PRNGKey(0)
    k_img, k_w, k_t = jax.random.split(key, 3)

    C, H, W = 4, 16, 16
    image = jax.random.uniform(k_img, (C, H, W), dtype=jnp.float32)   # CHW in [0,1)

    # Full module forward (host random kernel size, device random weight / lerp t).
    result = random_convolution(image, kernel_sizes=(3, 5), depthwise=False, seed=0)
    out = jax.block_until_ready(result["image"])
    assert out.shape == image.shape and out.dtype == jnp.float32
    assert bool(jnp.all(jnp.isfinite(out)))
    assert bool(jnp.all((out >= 0.0) & (out <= 1.0)))

    # Correctness of the Pallas hot path against lax.conv for both groupings and
    # kernel sizes; lane_tile=128 forces a multi-step, double-buffered grid.
    for depthwise in (False, True):
        for ksz in (3, 5):
            groups = C if depthwise else 1
            w = jax.random.normal(k_w, (C, C // groups, ksz, ksz), dtype=jnp.float32)
            w = w / jnp.sum(w, axis=(-3, -2, -1), keepdims=True)
            t = jax.random.uniform(k_t, (), dtype=jnp.float32)
            got = jax.block_until_ready(
                conv_lerp_clamp(image, w, t, depthwise=depthwise, lane_tile=128))
            want = _reference(image, w, t, depthwise=depthwise)
            assert got.shape == want.shape
            assert jnp.allclose(got, want, atol=1e-4, rtol=1e-4), (
                f"mismatch (depthwise={depthwise}, k={ksz}): "
                f"{float(jnp.max(jnp.abs(got - want)))}")

    print("KERNEL_OK")
</pallas_src>

<mosaic_0001>
module attributes {stable_mosaic.version = 11 : i64} {
  func.func @_conv_lerp_clamp_kernel(%arg0: i32, %arg1: i32, %arg2: memref<4x896xf32, #tpu.memory_space<any>>, %arg3: memref<4x100xf32, #tpu.memory_space<vmem>>, %arg4: memref<1xf32, #tpu.memory_space<smem>>, %arg5: memref<4x256xf32, #tpu.memory_space<vmem>>, %arg6: memref<2x4x384xf32, #tpu.memory_space<vmem>>, %arg7: memref<2x!tpu.dma_semaphore, #tpu.memory_space<semaphore_mem>>) attributes {dimension_semantics = [#tpu.dimension_semantics<parallel>, #tpu.dimension_semantics<arbitrary>], iteration_bounds = array<i64: 2, 1>, scalar_prefetch = 0 : i64, scratch_operands = 2 : i64, tpu.core_type = #tpu.core_type<tc>, window_params = [{}, {pipeline_mode = #tpu.pipeline_mode<synchronous>, transform_indices = @transform_1, window_bounds = array<i64: 4, 100>}, {transform_indices = @transform_2, window_bounds = array<i64: 1>}, {transform_indices = @transform_3, window_bounds = array<i64: 4, 256>}]} {
    %c1_i32 = arith.constant 1 : i32
    %0 = arith.muli %arg0, %c1_i32 : i32
    %1 = arith.addi %0, %arg1 : i32
    %c1_i32_0 = arith.constant 1 : i32
    %2 = arith.andi %arg1, %c1_i32_0 : i32
    %c0_i32 = arith.constant 0 : i32
    %3 = arith.cmpi eq, %arg1, %c0_i32 : i32
    %4 = arith.extui %3 : i1 to i32
    %c0_i32_1 = arith.constant 0 : i32
    %5 = arith.cmpi ne, %4, %c0_i32_1 : i32
    scf.if %5 {
      %c256_i32 = arith.constant 256 : i32
      %108 = arith.muli %1, %c256_i32 : i32
      %109 = tpu.assume_multiple %108, 128 : i32
      %c0_i32_95 = arith.constant 0 : i32
      %c0_i32_96 = arith.constant 0 : i32
      %c0_i32_97 = arith.constant 0 : i32
      %110 = tpu.memref_slice %arg2[%c0_i32_97, %109] : memref<4x896xf32, #tpu.memory_space<any>> -> memref<4x384xf32, #tpu.memory_space<any>>
      %c0_i32_98 = arith.constant 0 : i32
      %c0_i32_99 = arith.constant 0 : i32
      %111 = tpu.memref_slice %arg6[%c0_i32_95, %c0_i32_98, %c0_i32_99] : memref<2x4x384xf32, #tpu.memory_space<vmem>> -> memref<1x4x384xf32, #tpu.memory_space<vmem>>
      %112 = tpu.memref_squeeze %111 : memref<1x4x384xf32, #tpu.memory_space<vmem>> -> memref<4x384xf32, #tpu.memory_space<vmem>>
      %113 = tpu.memref_slice %arg7[%c0_i32_96] : memref<2x!tpu.dma_semaphore, #tpu.memory_space<semaphore_mem>> -> memref<1x!tpu.dma_semaphore, #tpu.memory_space<semaphore_mem>>
      %114 = tpu.memref_squeeze %113 : memref<1x!tpu.dma_semaphore, #tpu.memory_space<semaphore_mem>> -> memref<!tpu.dma_semaphore, #tpu.memory_space<semaphore_mem>>
      tpu.enqueue_dma source(%110 : memref<4x384xf32, #tpu.memory_space<any>>) target(%112 : memref<4x384xf32, #tpu.memory_space<vmem>>) target_semaphore(%114 : memref<!tpu.dma_semaphore, #tpu.memory_space<semaphore_mem>>)
    } else {
    }
    %c0_i32_2 = arith.constant 0 : i32
    %c0_i32_3 = arith.constant 0 : i32
    %6 = tpu.memref_slice %arg2[%c0_i32_2, %c0_i32_3] : memref<4x896xf32, #tpu.memory_space<any>> -> memref<4x384xf32, #tpu.memory_space<any>>
    %c0_i32_4 = arith.constant 0 : i32
    %c0_i32_5 = arith.constant 0 : i32
    %7 = tpu.memref_slice %arg6[%2, %c0_i32_4, %c0_i32_5] : memref<2x4x384xf32, #tpu.memory_space<vmem>> -> memref<1x4x384xf32, #tpu.memory_space<vmem>>
    %8 = tpu.memref_squeeze %7 : memref<1x4x384xf32, #tpu.memory_space<vmem>> -> memref<4x384xf32, #tpu.memory_space<vmem>>
    %9 = tpu.memref_slice %arg7[%2] : memref<2x!tpu.dma_semaphore, #tpu.memory_space<semaphore_mem>> -> memref<1x!tpu.dma_semaphore, #tpu.memory_space<semaphore_mem>>
    %10 = tpu.memref_squeeze %9 : memref<1x!tpu.dma_semaphore, #tpu.memory_space<semaphore_mem>> -> memref<!tpu.dma_semaphore, #tpu.memory_space<semaphore_mem>>
    tpu.wait_dma2 semaphore(%10 : memref<!tpu.dma_semaphore, #tpu.memory_space<semaphore_mem>>) src(%6 : memref<4x384xf32, #tpu.memory_space<any>>) dst(%8 : memref<4x384xf32, #tpu.memory_space<vmem>>)
    %c1_i32_6 = arith.constant 1 : i32
    %11 = arith.addi %arg1, %c1_i32_6 : i32
    %c1_i32_7 = arith.constant 1 : i32
    %12 = arith.cmpi slt, %11, %c1_i32_7 : i32
    %13 = arith.extui %12 : i1 to i32
    %c0_i32_8 = arith.constant 0 : i32
    %14 = arith.cmpi ne, %13, %c0_i32_8 : i32
    scf.if %14 {
      %c1_i32_95 = arith.constant 1 : i32
      %108 = arith.addi %1, %c1_i32_95 : i32
      %c1_i32_96 = arith.constant 1 : i32
      %109 = arith.subi %c1_i32_96, %2 : i32
      %c256_i32 = arith.constant 256 : i32
      %110 = arith.muli %108, %c256_i32 : i32
      %111 = tpu.assume_multiple %110, 128 : i32
      %c0_i32_97 = arith.constant 0 : i32
      %112 = tpu.memref_slice %arg2[%c0_i32_97, %111] : memref<4x896xf32, #tpu.memory_space<any>> -> memref<4x384xf32, #tpu.memory_space<any>>
      %c0_i32_98 = arith.constant 0 : i32
      %c0_i32_99 = arith.constant 0 : i32
      %113 = tpu.memref_slice %arg6[%109, %c0_i32_98, %c0_i32_99] : memref<2x4x384xf32, #tpu.memory_space<vmem>> -> memref<1x4x384xf32, #tpu.memory_space<vmem>>
      %114 = tpu.memref_squeeze %113 : memref<1x4x384xf32, #tpu.memory_space<vmem>> -> memref<4x384xf32, #tpu.memory_space<vmem>>
      %115 = tpu.memref_slice %arg7[%109] : memref<2x!tpu.dma_semaphore, #tpu.memory_space<semaphore_mem>> -> memref<1x!tpu.dma_semaphore, #tpu.memory_space<semaphore_mem>>
      %116 = tpu.memref_squeeze %115 : memref<1x!tpu.dma_semaphore, #tpu.memory_space<semaphore_mem>> -> memref<!tpu.dma_semaphore, #tpu.memory_space<semaphore_mem>>
      tpu.enqueue_dma source(%112 : memref<4x384xf32, #tpu.memory_space<any>>) target(%114 : memref<4x384xf32, #tpu.memory_space<vmem>>) target_semaphore(%116 : memref<!tpu.dma_semaphore, #tpu.memory_space<semaphore_mem>>)
    } else {
    }
    %c0_i32_9 = arith.constant 0 : i32
    %c0_i32_10 = arith.constant 0 : i32
    %15 = tpu.memref_slice %arg6[%2, %c0_i32_9, %c0_i32_10] : memref<2x4x384xf32, #tpu.memory_space<vmem>> -> memref<1x4x384xf32, #tpu.memory_space<vmem>>
    %16 = tpu.memref_squeeze %15 : memref<1x4x384xf32, #tpu.memory_space<vmem>> -> memref<4x384xf32, #tpu.memory_space<vmem>>
    %c0 = arith.constant 0 : index
    %c0_11 = arith.constant 0 : index
    %17 = vector.load %16[%c0, %c0_11] : memref<4x384xf32, #tpu.memory_space<vmem>>, vector<4x256xf32>
    %c0_i32_12 = arith.constant 0 : i32
    %c0_i32_13 = arith.constant 0 : i32
    %18 = tpu.memref_slice %arg6[%2, %c0_i32_12, %c0_i32_13] : memref<2x4x384xf32, #tpu.memory_space<vmem>> -> memref<1x4x384xf32, #tpu.memory_space<vmem>>
    %19 = tpu.memref_squeeze %18 : memref<1x4x384xf32, #tpu.memory_space<vmem>> -> memref<4x384xf32, #tpu.memory_space<vmem>>
    %c0_14 = arith.constant 0 : index
    %c1 = arith.constant 1 : index
    %20 = vector.load %19[%c0_14, %c1] : memref<4x384xf32, #tpu.memory_space<vmem>>, vector<4x256xf32>
    %c0_i32_15 = arith.constant 0 : i32
    %c0_i32_16 = arith.constant 0 : i32
    %21 = tpu.memref_slice %arg6[%2, %c0_i32_15, %c0_i32_16] : memref<2x4x384xf32, #tpu.memory_space<vmem>> -> memref<1x4x384xf32, #tpu.memory_space<vmem>>
    %22 = tpu.memref_squeeze %21 : memref<1x4x384xf32, #tpu.memory_space<vmem>> -> memref<4x384xf32, #tpu.memory_space<vmem>>
    %c0_17 = arith.constant 0 : index
    %c2 = arith.constant 2 : index
    %23 = vector.load %22[%c0_17, %c2] : memref<4x384xf32, #tpu.memory_space<vmem>>, vector<4x256xf32>
    %c0_i32_18 = arith.constant 0 : i32
    %c0_i32_19 = arith.constant 0 : i32
    %24 = tpu.memref_slice %arg6[%2, %c0_i32_18, %c0_i32_19] : memref<2x4x384xf32, #tpu.memory_space<vmem>> -> memref<1x4x384xf32, #tpu.memory_space<vmem>>
    %25 = tpu.memref_squeeze %24 : memref<1x4x384xf32, #tpu.memory_space<vmem>> -> memref<4x384xf32, #tpu.memory_space<vmem>>
    %c0_20 = arith.constant 0 : index
    %c3 = arith.constant 3 : index
    %26 = vector.load %25[%c0_20, %c3] : memref<4x384xf32, #tpu.memory_space<vmem>>, vector<4x256xf32>
    %c0_i32_21 = arith.constant 0 : i32
    %c0_i32_22 = arith.constant 0 : i32
    %27 = tpu.memref_slice %arg6[%2, %c0_i32_21, %c0_i32_22] : memref<2x4x384xf32, #tpu.memory_space<vmem>> -> memref<1x4x384xf32, #tpu.memory_space<vmem>>
    %28 = tpu.memref_squeeze %27 : memref<1x4x384xf32, #tpu.memory_space<vmem>> -> memref<4x384xf32, #tpu.memory_space<vmem>>
    %c0_23 = arith.constant 0 : index
    %c4 = arith.constant 4 : index
    %29 = vector.load %28[%c0_23, %c4] : memref<4x384xf32, #tpu.memory_space<vmem>>, vector<4x256xf32>
    %c0_i32_24 = arith.constant 0 : i32
    %c0_i32_25 = arith.constant 0 : i32
    %30 = tpu.memref_slice %arg6[%2, %c0_i32_24, %c0_i32_25] : memref<2x4x384xf32, #tpu.memory_space<vmem>> -> memref<1x4x384xf32, #tpu.memory_space<vmem>>
    %31 = tpu.memref_squeeze %30 : memref<1x4x384xf32, #tpu.memory_space<vmem>> -> memref<4x384xf32, #tpu.memory_space<vmem>>
    %c0_26 = arith.constant 0 : index
    %c20 = arith.constant 20 : index
    %32 = vector.load %31[%c0_26, %c20] : memref<4x384xf32, #tpu.memory_space<vmem>>, vector<4x256xf32>
    %c0_i32_27 = arith.constant 0 : i32
    %c0_i32_28 = arith.constant 0 : i32
    %33 = tpu.memref_slice %arg6[%2, %c0_i32_27, %c0_i32_28] : memref<2x4x384xf32, #tpu.memory_space<vmem>> -> memref<1x4x384xf32, #tpu.memory_space<vmem>>
    %34 = tpu.memref_squeeze %33 : memref<1x4x384xf32, #tpu.memory_space<vmem>> -> memref<4x384xf32, #tpu.memory_space<vmem>>
    %c0_29 = arith.constant 0 : index
    %c21 = arith.constant 21 : index
    %35 = vector.load %34[%c0_29, %c21] : memref<4x384xf32, #tpu.memory_space<vmem>>, vector<4x256xf32>
    %c0_i32_30 = arith.constant 0 : i32
    %c0_i32_31 = arith.constant 0 : i32
    %36 = tpu.memref_slice %arg6[%2, %c0_i32_30, %c0_i32_31] : memref<2x4x384xf32, #tpu.memory_space<vmem>> -> memref<1x4x384xf32, #tpu.memory_space<vmem>>
    %37 = tpu.memref_squeeze %36 : memref<1x4x384xf32, #tpu.memory_space<vmem>> -> memref<4x384xf32, #tpu.memory_space<vmem>>
    %c0_32 = arith.constant 0 : index
    %c22 = arith.constant 22 : index
    %38 = vector.load %37[%c0_32, %c22] : memref<4x384xf32, #tpu.memory_space<vmem>>, vector<4x256xf32>
    %c0_i32_33 = arith.constant 0 : i32
    %c0_i32_34 = arith.constant 0 : i32
    %39 = tpu.memref_slice %arg6[%2, %c0_i32_33, %c0_i32_34] : memref<2x4x384xf32, #tpu.memory_space<vmem>> -> memref<1x4x384xf32, #tpu.memory_space<vmem>>
    %40 = tpu.memref_squeeze %39 : memref<1x4x384xf32, #tpu.memory_space<vmem>> -> memref<4x384xf32, #tpu.memory_space<vmem>>
    %c0_35 = arith.constant 0 : index
    %c23 = arith.constant 23 : index
    %41 = vector.load %40[%c0_35, %c23] : memref<4x384xf32, #tpu.memory_space<vmem>>, vector<4x256xf32>
    %c0_i32_36 = arith.constant 0 : i32
    %c0_i32_37 = arith.constant 0 : i32
    %42 = tpu.memref_slice %arg6[%2, %c0_i32_36, %c0_i32_37] : memref<2x4x384xf32, #tpu.memory_space<vmem>> -> memref<1x4x384xf32, #tpu.memory_space<vmem>>
    %43 = tpu.memref_squeeze %42 : memref<1x4x384xf32, #tpu.memory_space<vmem>> -> memref<4x384xf32, #tpu.memory_space<vmem>>
    %c0_38 = arith.constant 0 : index
    %c24 = arith.constant 24 : index
    %44 = vector.load %43[%c0_38, %c24] : memref<4x384xf32, #tpu.memory_space<vmem>>, vector<4x256xf32>
    %c0_i32_39 = arith.constant 0 : i32
    %c0_i32_40 = arith.constant 0 : i32
    %45 = tpu.memref_slice %arg6[%2, %c0_i32_39, %c0_i32_40] : memref<2x4x384xf32, #tpu.memory_space<vmem>> -> memref<1x4x384xf32, #tpu.memory_space<vmem>>
    %46 = tpu.memref_squeeze %45 : memref<1x4x384xf32, #tpu.memory_space<vmem>> -> memref<4x384xf32, #tpu.memory_space<vmem>>
    %c0_41 = arith.constant 0 : index
    %c40 = arith.constant 40 : index
    %47 = vector.load %46[%c0_41, %c40] : memref<4x384xf32, #tpu.memory_space<vmem>>, vector<4x256xf32>
    %c0_i32_42 = arith.constant 0 : i32
    %c0_i32_43 = arith.constant 0 : i32
    %48 = tpu.memref_slice %arg6[%2, %c0_i32_42, %c0_i32_43] : memref<2x4x384xf32, #tpu.memory_space<vmem>> -> memref<1x4x384xf32, #tpu.memory_space<vmem>>
    %49 = tpu.memref_squeeze %48 : memref<1x4x384xf32, #tpu.memory_space<vmem>> -> memref<4x384xf32, #tpu.memory_space<vmem>>
    %c0_44 = arith.constant 0 : index
    %c41 = arith.constant 41 : index
    %50 = vector.load %49[%c0_44, %c41] : memref<4x384xf32, #tpu.memory_space<vmem>>, vector<4x256xf32>
    %c0_i32_45 = arith.constant 0 : i32
    %c0_i32_46 = arith.constant 0 : i32
    %51 = tpu.memref_slice %arg6[%2, %c0_i32_45, %c0_i32_46] : memref<2x4x384xf32, #tpu.memory_space<vmem>> -> memref<1x4x384xf32, #tpu.memory_space<vmem>>
    %52 = tpu.memref_squeeze %51 : memref<1x4x384xf32, #tpu.memory_space<vmem>> -> memref<4x384xf32, #tpu.memory_space<vmem>>
    %c0_47 = arith.constant 0 : index
    %c42 = arith.constant 42 : index
    %53 = vector.load %52[%c0_47, %c42] : memref<4x384xf32, #tpu.memory_space<vmem>>, vector<4x256xf32>
    %c0_i32_48 = arith.constant 0 : i32
    %c0_i32_49 = arith.constant 0 : i32
    %54 = tpu.memref_slice %arg6[%2, %c0_i32_48, %c0_i32_49] : memref<2x4x384xf32, #tpu.memory_space<vmem>> -> memref<1x4x384xf32, #tpu.memory_space<vmem>>
    %55 = tpu.memref_squeeze %54 : memref<1x4x384xf32, #tpu.memory_space<vmem>> -> memref<4x384xf32, #tpu.memory_space<vmem>>
    %c0_50 = arith.constant 0 : index
    %c43 = arith.constant 43 : index
    %56 = vector.load %55[%c0_50, %c43] : memref<4x384xf32, #tpu.memory_space<vmem>>, vector<4x256xf32>
    %c0_i32_51 = arith.constant 0 : i32
    %c0_i32_52 = arith.constant 0 : i32
    %57 = tpu.memref_slice %arg6[%2, %c0_i32_51, %c0_i32_52] : memref<2x4x384xf32, #tpu.memory_space<vmem>> -> memref<1x4x384xf32, #tpu.memory_space<vmem>>
    %58 = tpu.memref_squeeze %57 : memref<1x4x384xf32, #tpu.memory_space<vmem>> -> memref<4x384xf32, #tpu.memory_space<vmem>>
    %c0_53 = arith.constant 0 : index
    %c44 = arith.constant 44 : index
    %59 = vector.load %58[%c0_53, %c44] : memref<4x384xf32, #tpu.memory_space<vmem>>, vector<4x256xf32>
    %c0_i32_54 = arith.constant 0 : i32
    %c0_i32_55 = arith.constant 0 : i32
    %60 = tpu.memref_slice %arg6[%2, %c0_i32_54, %c0_i32_55] : memref<2x4x384xf32, #tpu.memory_space<vmem>> -> memref<1x4x384xf32, #tpu.memory_space<vmem>>
    %61 = tpu.memref_squeeze %60 : memref<1x4x384xf32, #tpu.memory_space<vmem>> -> memref<4x384xf32, #tpu.memory_space<vmem>>
    %c0_56 = arith.constant 0 : index
    %c60 = arith.constant 60 : index
    %62 = vector.load %61[%c0_56, %c60] : memref<4x384xf32, #tpu.memory_space<vmem>>, vector<4x256xf32>
    %c0_i32_57 = arith.constant 0 : i32
    %c0_i32_58 = arith.constant 0 : i32
    %63 = tpu.memref_slice %arg6[%2, %c0_i32_57, %c0_i32_58] : memref<2x4x384xf32, #tpu.memory_space<vmem>> -> memref<1x4x384xf32, #tpu.memory_space<vmem>>
    %64 = tpu.memref_squeeze %63 : memref<1x4x384xf32, #tpu.memory_space<vmem>> -> memref<4x384xf32, #tpu.memory_space<vmem>>
    %c0_59 = arith.constant 0 : index
    %c61 = arith.constant 61 : index
    %65 = vector.load %64[%c0_59, %c61] : memref<4x384xf32, #tpu.memory_space<vmem>>, vector<4x256xf32>
    %c0_i32_60 = arith.constant 0 : i32
    %c0_i32_61 = arith.constant 0 : i32
    %66 = tpu.memref_slice %arg6[%2, %c0_i32_60, %c0_i32_61] : memref<2x4x384xf32, #tpu.memory_space<vmem>> -> memref<1x4x384xf32, #tpu.memory_space<vmem>>
    %67 = tpu.memref_squeeze %66 : memref<1x4x384xf32, #tpu.memory_space<vmem>> -> memref<4x384xf32, #tpu.memory_space<vmem>>
    %c0_62 = arith.constant 0 : index
    %c62 = arith.constant 62 : index
    %68 = vector.load %67[%c0_62, %c62] : memref<4x384xf32, #tpu.memory_space<vmem>>, vector<4x256xf32>
    %c0_i32_63 = arith.constant 0 : i32
    %c0_i32_64 = arith.constant 0 : i32
    %69 = tpu.memref_slice %arg6[%2, %c0_i32_63, %c0_i32_64] : memref<2x4x384xf32, #tpu.memory_space<vmem>> -> memref<1x4x384xf32, #tpu.memory_space<vmem>>
    %70 = tpu.memref_squeeze %69 : memref<1x4x384xf32, #tpu.memory_space<vmem>> -> memref<4x384xf32, #tpu.memory_space<vmem>>
    %c0_65 = arith.constant 0 : index
    %c63 = arith.constant 63 : index
    %71 = vector.load %70[%c0_65, %c63] : memref<4x384xf32, #tpu.memory_space<vmem>>, vector<4x256xf32>
    %c0_i32_66 = arith.constant 0 : i32
    %c0_i32_67 = arith.constant 0 : i32
    %72 = tpu.memref_slice %arg6[%2, %c0_i32_66, %c0_i32_67] : memref<2x4x384xf32, #tpu.memory_space<vmem>> -> memref<1x4x384xf32, #tpu.memory_space<vmem>>
    %73 = tpu.memref_squeeze %72 : memref<1x4x384xf32, #tpu.memory_space<vmem>> -> memref<4x384xf32, #tpu.memory_space<vmem>>
    %c0_68 = arith.constant 0 : index
    %c64 = arith.constant 64 : index
    %74 = vector.load %73[%c0_68, %c64] : memref<4x384xf32, #tpu.memory_space<vmem>>, vector<4x256xf32>
    %c0_i32_69 = arith.constant 0 : i32
    %c0_i32_70 = arith.constant 0 : i32
    %75 = tpu.memref_slice %arg6[%2, %c0_i32_69, %c0_i32_70] : memref<2x4x384xf32, #tpu.memory_space<vmem>> -> memref<1x4x384xf32, #tpu.memory_space<vmem>>
    %76 = tpu.memref_squeeze %75 : memref<1x4x384xf32, #tpu.memory_space<vmem>> -> memref<4x384xf32, #tpu.memory_space<vmem>>
    %c0_71 = arith.constant 0 : index
    %c80 = arith.constant 80 : index
    %77 = vector.load %76[%c0_71, %c80] : memref<4x384xf32, #tpu.memory_space<vmem>>, vector<4x256xf32>
    %c0_i32_72 = arith.constant 0 : i32
    %c0_i32_73 = arith.constant 0 : i32
    %78 = tpu.memref_slice %arg6[%2, %c0_i32_72, %c0_i32_73] : memref<2x4x384xf32, #tpu.memory_space<vmem>> -> memref<1x4x384xf32, #tpu.memory_space<vmem>>
    %79 = tpu.memref_squeeze %78 : memref<1x4x384xf32, #tpu.memory_space<vmem>> -> memref<4x384xf32, #tpu.memory_space<vmem>>
    %c0_74 = arith.constant 0 : index
    %c81 = arith.constant 81 : index
    %80 = vector.load %79[%c0_74, %c81] : memref<4x384xf32, #tpu.memory_space<vmem>>, vector<4x256xf32>
    %c0_i32_75 = arith.constant 0 : i32
    %c0_i32_76 = arith.constant 0 : i32
    %81 = tpu.memref_slice %arg6[%2, %c0_i32_75, %c0_i32_76] : memref<2x4x384xf32, #tpu.memory_space<vmem>> -> memref<1x4x384xf32, #tpu.memory_space<vmem>>
    %82 = tpu.memref_squeeze %81 : memref<1x4x384xf32, #tpu.memory_space<vmem>> -> memref<4x384xf32, #tpu.memory_space<vmem>>
    %c0_77 = arith.constant 0 : index
    %c82 = arith.constant 82 : index
    %83 = vector.load %82[%c0_77, %c82] : memref<4x384xf32, #tpu.memory_space<vmem>>, vector<4x256xf32>
    %c0_i32_78 = arith.constant 0 : i32
    %c0_i32_79 = arith.constant 0 : i32
    %84 = tpu.memref_slice %arg6[%2, %c0_i32_78, %c0_i32_79] : memref<2x4x384xf32, #tpu.memory_space<vmem>> -> memref<1x4x384xf32, #tpu.memory_space<vmem>>
    %85 = tpu.memref_squeeze %84 : memref<1x4x384xf32, #tpu.memory_space<vmem>> -> memref<4x384xf32, #tpu.memory_space<vmem>>
    %c0_80 = arith.constant 0 : index
    %c83 = arith.constant 83 : index
    %86 = vector.load %85[%c0_80, %c83] : memref<4x384xf32, #tpu.memory_space<vmem>>, vector<4x256xf32>
    %c0_i32_81 = arith.constant 0 : i32
    %c0_i32_82 = arith.constant 0 : i32
    %87 = tpu.memref_slice %arg6[%2, %c0_i32_81, %c0_i32_82] : memref<2x4x384xf32, #tpu.memory_space<vmem>> -> memref<1x4x384xf32, #tpu.memory_space<vmem>>
    %88 = tpu.memref_squeeze %87 : memref<1x4x384xf32, #tpu.memory_space<vmem>> -> memref<4x384xf32, #tpu.memory_space<vmem>>
    %c0_83 = arith.constant 0 : index
    %c84 = arith.constant 84 : index
    %89 = vector.load %88[%c0_83, %c84] : memref<4x384xf32, #tpu.memory_space<vmem>>, vector<4x256xf32>
    %90 = tpu.concatenate %17, %20, %23, %26, %29, %32, %35, %38, %41, %44, %47, %50, %53, %56, %59, %62 in 0 : vector<4x256xf32>, vector<4x256xf32>, vector<4x256xf32>, vector<4x256xf32>, vector<4x256xf32>, vector<4x256xf32>, vector<4x256xf32>, vector<4x256xf32>, vector<4x256xf32>, vector<4x256xf32>, vector<4x256xf32>, vector<4x256xf32>, vector<4x256xf32>, vector<4x256xf32>, vector<4x256xf32>, vector<4x256xf32> -> vector<64x256xf32>
    %91 = tpu.concatenate %65, %68, %71, %74, %77, %80, %83, %86, %89 in 0 : vector<4x256xf32>, vector<4x256xf32>, vector<4x256xf32>, vector<4x256xf32>, vector<4x256xf32>, vector<4x256xf32>, vector<4x256xf32>, vector<4x256xf32>, vector<4x256xf32> -> vector<36x256xf32>
    %92 = tpu.concatenate %90, %91 in 0 : vector<64x256xf32>, vector<36x256xf32> -> vector<100x256xf32>
    %c0_84 = arith.constant 0 : index
    %c0_85 = arith.constant 0 : index
    %93 = vector.load %arg3[%c0_84, %c0_85] : memref<4x100xf32, #tpu.memory_space<vmem>>, vector<4x100xf32>
    %cst = arith.constant dense<0.000000e+00> : vector<4x256xf32>
    %94 = tpu.matmul %93, %92, %cst {dimension_numbers = #tpu.dot_dimension_numbers<[1], [0], [0], [1], [0, 0, 1, 1], [], []>} : vector<4x100xf32>, vector<100x256xf32>, vector<4x256xf32> -> vector<4x256xf32>
    %c0_i32_86 = arith.constant 0 : i32
    %c0_i32_87 = arith.constant 0 : i32
    %95 = tpu.memref_slice %arg6[%2, %c0_i32_86, %c0_i32_87] : memref<2x4x384xf32, #tpu.memory_space<vmem>> -> memref<1x4x384xf32, #tpu.memory_space<vmem>>
    %96 = tpu.memref_squeeze %95 : memref<1x4x384xf32, #tpu.memory_space<vmem>> -> memref<4x384xf32, #tpu.memory_space<vmem>>
    %c0_88 = arith.constant 0 : index
    %c42_89 = arith.constant 42 : index
    %97 = vector.load %96[%c0_88, %c42_89] : memref<4x384xf32, #tpu.memory_space<vmem>>, vector<4x256xf32>
    %c0_90 = arith.constant 0 : index
    %98 = memref.load %arg4[%c0_90] : memref<1xf32, #tpu.memory_space<smem>>
    %99 = arith.subf %94, %97 : vector<4x256xf32>
    %100 = vector.broadcast %98 : f32 to vector<4x256xf32>
    %101 = arith.mulf %99, %100 : vector<4x256xf32>
    %102 = arith.addf %97, %101 : vector<4x256xf32>
    %cst_91 = arith.constant 0.000000e+00 : f32
    %cst_92 = arith.constant 1.000000e+00 : f32
    %103 = vector.broadcast %cst_91 : f32 to vector<4x256xf32>
    %104 = arith.maximumf %103, %102 : vector<4x256xf32>
    %105 = vector.broadcast %cst_92 : f32 to vector<4x256xf32>
    %106 = arith.minimumf %105, %104 : vector<4x256xf32>
    %c0_93 = arith.constant 0 : index
    %c0_94 = arith.constant 0 : index
    %107 = vector.load %arg5[%c0_93, %c0_94] : memref<4x256xf32, #tpu.memory_space<vmem>>, vector<4x256xf32>
    tpu.vector_store %arg5[%c0_93, %c0_94], %106 {strides = array<i32>} : memref<4x256xf32, #tpu.memory_space<vmem>>, vector<4x256xf32>,
    return
  }
  func.func @transform_1(%arg0: i32, %arg1: i32) -> (i32, i32) {
    %c0_i32 = arith.constant 0 : i32
    %c0_i32_0 = arith.constant 0 : i32
    %c0_i32_1 = arith.constant 0 : i32
    return %c0_i32, %c0_i32_0 : i32, i32
  }
  func.func @transform_2(%arg0: i32, %arg1: i32) -> i32 {
    %c0_i32 = arith.constant 0 : i32
    %c0_i32_0 = arith.constant 0 : i32
    return %c0_i32 : i32
  }
  func.func @transform_3(%arg0: i32, %arg1: i32) -> (i32, i32) {
    %c1_i32 = arith.constant 1 : i32
    %0 = arith.muli %arg0, %c1_i32 : i32
    %1 = arith.addi %0, %arg1 : i32
    %c0_i32 = arith.constant 0 : i32
    %c0_i32_0 = arith.constant 0 : i32
    return %c0_i32, %1 : i32, i32
  }
}

</mosaic_0001>

<llo_original>
// kernel: conv_lerp_clamp.1
$region0: #{conv_lerp_clamp.1}
  #allocation0 [shape = 'u32[]', space=smem, size = 0x4, offset = 0x4, fixed_abs, tag = 'smem constant byte address 0x4 - core index']
  #allocation1 [shape = 'u32[144,128]{1,0:T(1,128)}', space=vmem, size = 0x12000, scoped, tag = 'internal scratch']
  #allocation2 [shape = 'f32[2,4,384]{2,1,0:T(4,128)}', space=vmem, size = 0x3000, scoped, tag = 'scratch operand']
  #allocation3 [shape = 's32[2]{0}', space=sflag, size = 0x8, scoped, tag = 'scratch operand']
  #allocation4 [shape = 'f32[1]{0:T(128)S(6)}', space=smem, size = 0x200, scoped, tag = 'scoped memory for conv_lerp_clamp.1']
  #allocation5 [shape = 's32[]', space=sflag, size = 0x4, offset = 0, fixed_abs, tag = 'sflag constant byte address 0x0 - dummy sync flag']
  #allocation6 [shape = 's32[]', space=sflag, size = 0x4, offset = 0, fixed_abs, tag = 'sflag constant byte address 0x0 - dummy sync flag']
  %s0 = inlined_call_operand.vmem [shape: f32[4,896], index: 0, kind: input, shape index: {}]
  %s1 = inlined_call_operand.vmem [shape: f32[4,100], index: 1, kind: input, shape index: {}]
  %s2 = inlined_call_operand.<no memory space> [shape: f32[1], index: 2, kind: input, shape index: {}]
  %s3 = inlined_call_operand.vmem [shape: f32[4,512], index: 3, kind: output, shape index: {}]
  %s4 = sld [smem:[#allocation0]]
  $region123: #{conv_lerp_clamp.1} parent=0
    _
  %s6 = ssub.s32 1, %s4
  %s7 = scalar_select 0, %s6, %s4
  %8 = sst [smem:[#allocation4]] %s2
  loop: start=0, step=1, limit=4
  $region2: #{conv_lerp_clamp.1} parent=0 // loop_pre_header
    _
  $region3: #{conv_lerp_clamp.1} parent=0 // loop_header
    %s10 = sphi 0, %s14
    %p11 = scmp.ge.s32.totalorder %s10, 4
    %s17 = sphi 0, %s29
    %s18 = sphi 0, %s25
    %s19 = sphi 0, %s17
    %s20 = sphi 0, %s18
    %s21 = sphi 0, %s19
    %s22 = sphi 0, %s20
    %s30 = sphi 0, %s30
    %s32 = sphi 0, %s30
    %s33 = sphi 0, %s32
    %s47 = sphi 0, %s33
    %s51 = sphi 0, %s51
    %s53 = sphi 0, %s51
    %s54 = sphi 0, %s53
    %s68 = sphi 0, %s54
    %s76 = sphi 0, %s78
    %s79 = sphi 0, %s76
    %s80 = sphi 0, %s79
    %s96 = sphi 0, %s80
  $region4: #{conv_lerp_clamp.1} parent=0 // loop_header_branch
    %13 = sbr.rel (%p11) target = $region8
  $region5: #{conv_lerp_clamp.1} parent=0 // loop_body
    %s15 = ssub.s32 %s10, 1
    %s16 = ssub.s32 %s10, 2
    %s23 = sadd.s32 1, %s18
    %p24 = scmp.ge.s32.totalorder %s23, 1
    %s25 = scalar_select %p24, 0, %s23
    %s26 = sadd.s32 1, %s17
    %s27 = scalar_select %p24, %s26, %s17
    %p28 = scmp.ge.s32.totalorder %s27, 2
    %s29 = scalar_select %p28, 0, %s27
    %s31 = sadd.s32 %s30, 1
    %p34 = scmp.eq.s32.totalorder %s10, 1
    %p35 = scmp.ne.s32.totalorder %s30, %s32
    %p36 = scmp.eq.s32.totalorder %s10, 0
    %p37 = por %p35, %p36
    %p38 = scmp.ne.s32.totalorder %s30, %s32
    %p39 = scmp.eq.s32.totalorder %s15, 1
    %p40 = por %p38, %p39
    %p41 = scmp.ne.s32.totalorder %s32, %s33
    %p42 = scmp.eq.s32.totalorder %s15, 0
    %p43 = por %p41, %p42
    %p44 = scmp.ne.s32.totalorder %s32, %s33
    %p45 = scmp.eq.s32.totalorder %s16, 1
    %p46 = por %p44, %p45
    %p48 = scmp.ne.s32.totalorder %s33, %s47
    %p49 = scmp.eq.s32.totalorder %s16, 0
    %p50 = por %p48, %p49
    %s52 = sadd.s32 %s51, 1
    %p55 = scmp.eq.s32.totalorder %s10, 1
    %p56 = scmp.ne.s32.totalorder %s51, %s53
    %p57 = scmp.eq.s32.totalorder %s10, 0
    %p58 = por %p56, %p57
    %p59 = scmp.ne.s32.totalorder %s51, %s53
    %p60 = scmp.eq.s32.totalorder %s15, 1
    %p61 = por %p59, %p60
    %p62 = scmp.ne.s32.totalorder %s53, %s54
    %p63 = scmp.eq.s32.totalorder %s15, 0
    %p64 = por %p62, %p63
    %p65 = scmp.ne.s32.totalorder %s53, %s54
    %p66 = scmp.eq.s32.totalorder %s16, 1
    %p67 = por %p65, %p66
    %p69 = scmp.ne.s32.totalorder %s54, %s68
    %p70 = scmp.eq.s32.totalorder %s16, 0
    %p71 = por %p69, %p70
    %s72 = sadd.s32 %s17, %s18
    %s73 = sadd.s32 %s29, %s25
    %s74 = ssub.s32 %s72, %s73
    %p75 = scmp.eq.s32.totalorder %s74, 0
    %s77 = sadd.s32 %s76, 1
    %s78 = scalar_select %p75, %s76, %s77
    %p81 = pneg %p75
    %p82 = scmp.eq.s32.totalorder %s10, 1
    %p83 = por %p81, %p82
    %p84 = scmp.ne.s32.totalorder %s76, %s79
    %p85 = scmp.eq.s32.totalorder %s10, 0
    %p86 = por %p84, %p85
    %p87 = scmp.ne.s32.totalorder %s76, %s79
    %p88 = scmp.eq.s32.totalorder %s15, 1
    %p89 = por %p87, %p88
    %p90 = scmp.ne.s32.totalorder %s79, %s80
    %p91 = scmp.eq.s32.totalorder %s15, 0
    %p92 = por %p90, %p91
    %p93 = scmp.ne.s32.totalorder %s79, %s80
    %p94 = scmp.eq.s32.totalorder %s16, 1
    %p95 = por %p93, %p94
    %p97 = scmp.ne.s32.totalorder %s80, %s96
    %p98 = scmp.eq.s32.totalorder %s16, 0
    %p99 = por %p97, %p98
    %p100 = scmp.le.s32.totalorder 1, %s10
    %p101 = scmp.lt.s32.totalorder %s10, 3
    %p102 = pnand %p100, %p101
    %p103 = pneg %p102
    // Predicated region
    $region9: #{conv_lerp_clamp.1} parent=5 // pred_check
      _
    $region10: #{conv_lerp_clamp.1} parent=5 // pred_check_branch
      %105 = sbr.rel (%p102) target = $region12
    $region11: #{conv_lerp_clamp.1} parent=5 // pred_region
      %s106 = ssub.s32 %s10, 1
      // Predicated region
      $region13: #{conv_lerp_clamp.1} parent=11 // pred_check
        %p107 = pneg %p43
      $region14: #{conv_lerp_clamp.1} parent=11 // pred_check_branch
        %109 = sbr.rel (%p107) target = $region16
      $region15: #{conv_lerp_clamp.1} parent=11 // pred_region
        _
      $region16: #{conv_lerp_clamp.1} parent=11 // pred_fallthru
        _
      // Predicated region
      $region17: #{conv_lerp_clamp.1} parent=11 // pred_check
        %p110 = pneg %p64
      $region18: #{conv_lerp_clamp.1} parent=11 // pred_check_branch
        %112 = sbr.rel (%p110) target = $region20
      $region19: #{conv_lerp_clamp.1} parent=11 // pred_region
        _
      $region20: #{conv_lerp_clamp.1} parent=11 // pred_fallthru
        _
    $region12: #{conv_lerp_clamp.1} parent=5 // pred_fallthru
      _
    %p113 = scmp.lt.s32.totalorder %s10, 2
    // Predicated region
    $region21: #{conv_lerp_clamp.1} parent=5 // pred_check
      %p114 = pneg %p113
    $region22: #{conv_lerp_clamp.1} parent=5 // pred_check_branch
      %116 = sbr.rel (%p114) target = $region24
    $region23: #{conv_lerp_clamp.1} parent=5 // pred_region
      _
    $region24: #{conv_lerp_clamp.1} parent=5 // pred_fallthru
      _
    %p117 = scmp.le.s32.totalorder 1, %s10
    %p118 = scmp.lt.s32.totalorder %s10, 3
    %p119 = pnand %p117, %p118
    %p120 = pneg %p119
    // Predicated region
    $region25: #{conv_lerp_clamp.1} parent=5 // pred_check
      _
    $region26: #{conv_lerp_clamp.1} parent=5 // pred_check_branch
      %122 = sbr.rel (%p119) target = $region28
    $region27: #{conv_lerp_clamp.1} parent=5 // pred_region
      %s123 = ssub.s32 %s10, 1
      %p124 = pneg %p43
      %p125 = pneg %p40
      %p126 = pneg %p64
      %p127 = pneg %p61
      %p128 = pneg %p92
      %p129 = pneg %p89
      %s130 = sadd.s32 %s19, %s20
      %s131 = smul.u32 2, %s130
      %p132 = scmp.lt.s32.totalorder %s131, 3
      %s133 = scalar_select %p132, %s131, 3
      %s134 = smul.addr %s133, 4
      %s135 = scalar_lea.vmem %s3, %s134
      %s136 = sadd.s32 %s19, %s20
      %s137 = smul.u32 2, %s136
      %p138 = scmp.lt.s32.totalorder %s137, 3
      %s139 = scalar_select %p138, %s137, 3
      %s140 = smul.addr %s139, 4
      %s141 = scalar_lea.vmem %s3, %s140
      %s142 = sadd.s32 %s19, %s20
      %s143 = smul.u32 2, %s142
      %s144 = sadd.s32 %s19, %s20
      %s145 = sand.u32 %s20, 1
      %p146 = scmp.eq.s32.totalorder %s20, 0
      // Predicated region
      $region29: #{conv_lerp_clamp.1} parent=27 // pred_check
        %p147 = pneg %p146
      $region30: #{conv_lerp_clamp.1} parent=27 // pred_check_branch
        %149 = sbr.rel (%p147) target = $region32
      $region31: #{conv_lerp_clamp.1} parent=27 // pred_region
        %s150 = smul.u32 %s144, 256
        %s151 = sshra.s32 %s150, 7
        %s152 = sand.u32 %s150, 127
        %s153 = smul.addr %s151, 4
        %s154 = scalar_lea.vmem %s0, %s153
        %p156 = scmp.lt.u32.totalorder 12, 8
        %p157 = pneg %p156
        // Predicated region
        $region33: #{conv_lerp_clamp.1} parent=31 // pred_check
          _
        $region34: #{conv_lerp_clamp.1} parent=31 // pred_check_branch
          %159 = sbr.rel (%p156) target = $region36
        $region35: #{conv_lerp_clamp.1} parent=31 // pred_region
          %s174 = sand.u32 12, 7
          %p175 = scmp.eq.s32.totalorder %s174, 0
          %p176 = pneg %p175
          // Predicated region
          $region48: #{conv_lerp_clamp.1} parent=35 // pred_check
            _
          $region49: #{conv_lerp_clamp.1} parent=35 // pred_check_branch
            %178 = sbr.rel (%p175) target = $region51
          $region50: #{conv_lerp_clamp.1} parent=35 // pred_region
            %s179 = sand.u32 12, 7
            %s180 = ssub.s32 12, %s179
            %s181 = scalar_lea.vmem %s154, %s180
            %s182 = ssub.s32 12, %s179
            %s183 = scalar_lea.vmem [#allocation2], %s182
            loop: start=0, step=1, limit=1
            $region52: #{conv_lerp_clamp.1} parent=50 // loop_pre_header
              _
            $region53: #{conv_lerp_clamp.1} parent=50 // loop_header
              %s185 = sphi 0, %s189
              %p186 = scmp.ge.s32.totalorder %s185, 1
              %s190 = sphi %s154, %s154
              %s191 = sphi [#allocation2], [#allocation2]
            $region54: #{conv_lerp_clamp.1} parent=50 // loop_header_branch
              %188 = sbr.rel (%p186) target = $region58
            $region55: #{conv_lerp_clamp.1} parent=50 // loop_body
              %v192 = vld [vmem:[%s190] sm:$0xff]
              %193 = vst [vmem:[%s191] sm:$0xff] %v192
            $region56: #{conv_lerp_clamp.1} parent=50 // loop_footer
              %s189 = sadd.s32 1, %s185
            $region57: #{conv_lerp_clamp.1} parent=50 // loop_footer_branch
              %184 = sbr.rel target = $region53
            $region58: #{conv_lerp_clamp.1} parent=50 // loop_exit
              _
            %s194 = sshllo.u32 0, %s179
            loop: start=0, step=1, limit=1
            $region59: #{conv_lerp_clamp.1} parent=50 // loop_pre_header
              _
            $region60: #{conv_lerp_clamp.1} parent=50 // loop_header
              %s196 = sphi 0, %s200
              %p197 = scmp.ge.s32.totalorder %s196, 1
              %s201 = sphi %s181, %s181
              %s202 = sphi %s183, %s183
            $region61: #{conv_lerp_clamp.1} parent=50 // loop_header_branch
              %199 = sbr.rel (%p197) target = $region65
            $region62: #{conv_lerp_clamp.1} parent=50 // loop_body
              %v203 = vld [vmem:[%s201] sm:%s194]
              %204 = vst [vmem:[%s202] sm:%s194] %v203
            $region63: #{conv_lerp_clamp.1} parent=50 // loop_footer
              %s200 = sadd.s32 1, %s196
            $region64: #{conv_lerp_clamp.1} parent=50 // loop_footer_branch
              %195 = sbr.rel target = $region60
            $region65: #{conv_lerp_clamp.1} parent=50 // loop_exit
              _
          $region51: #{conv_lerp_clamp.1} parent=35 // pred_fallthru
            _
        $region36: #{conv_lerp_clamp.1} parent=31 // pred_fallthru
          _
        // Predicated region
        $region37: #{conv_lerp_clamp.1} parent=31 // pred_check
          %p160 = pneg %p156
        $region38: #{conv_lerp_clamp.1} parent=31 // pred_check_branch
          %162 = sbr.rel (%p160) target = $region40
        $region39: #{conv_lerp_clamp.1} parent=31 // pred_region
          %s163 = sshllo.u32 0, 12
          loop: start=0, step=1, limit=1
          $region41: #{conv_lerp_clamp.1} parent=39 // loop_pre_header
            _
          $region42: #{conv_lerp_clamp.1} parent=39 // loop_header
            %s165 = sphi 0, %s169
            %p166 = scmp.ge.s32.totalorder %s165, 1
            %s170 = sphi %s154, %s154
            %s171 = sphi [#allocation2], [#allocation2]
          $region43: #{conv_lerp_clamp.1} parent=39 // loop_header_branch
            %168 = sbr.rel (%p166) target = $region47
          $region44: #{conv_lerp_clamp.1} parent=39 // loop_body
            %v172 = vld [vmem:[%s170] sm:%s163]
            %173 = vst [vmem:[%s171] sm:%s163] %v172
          $region45: #{conv_lerp_clamp.1} parent=39 // loop_footer
            %s169 = sadd.s32 1, %s165
          $region46: #{conv_lerp_clamp.1} parent=39 // loop_footer_branch
            %164 = sbr.rel target = $region42
          $region47: #{conv_lerp_clamp.1} parent=39 // loop_exit
            _
        $region40: #{conv_lerp_clamp.1} parent=31 // pred_fallthru
          _
        // Predicated region
        $region66: #{conv_lerp_clamp.1} parent=31 // pred_check
          _
        $region67: #{conv_lerp_clamp.1} parent=31 // pred_check_branch
          %207 = sbr.rel (0) target = $region69
        $region68: #{conv_lerp_clamp.1} parent=31 // pred_region
          %208 = vsyncadd [#allocation3], 192
        $region69: #{conv_lerp_clamp.1} parent=31 // pred_fallthru
          _
      $region32: #{conv_lerp_clamp.1} parent=27 // pred_fallthru
        _
      %s209 = smul.u32 %s145, 3
      %s210 = smul.addr %s209, 4
      %s211 = scalar_lea.vmem [#allocation2], %s210
      %s212 = scalar_lea.sflag [#allocation3], %s145
      %s213 = smul.u32 4, 1
      %s214 = smul.u32 %s213, 3
      %s215 = sshll.u32 %s214, 4
      %216 = dma.done %s212, %s215
      %s217 = sadd.s32 %s20, 1
      %p218 = scmp.lt.s32.totalorder %s217, 1
      // Predicated region
      $region70: #{conv_lerp_clamp.1} parent=27 // pred_check
        %p219 = pneg %p218
      $region71: #{conv_lerp_clamp.1} parent=27 // pred_check_branch
        %221 = sbr.rel (%p219) target = $region73
      $region72: #{conv_lerp_clamp.1} parent=27 // pred_region
        %s222 = sadd.s32 %s144, 1
        %s223 = ssub.s32 1, %s145
        %s224 = smul.u32 %s222, 256
        %s225 = sshra.s32 %s224, 7
        %s226 = sand.u32 %s224, 127
        %s227 = smul.addr %s225, 4
        %s228 = scalar_lea.vmem %s0, %s227
        %s229 = smul.u32 %s223, 3
        %s230 = smul.addr %s229, 4
        %s231 = scalar_lea.vmem [#allocation2], %s230
        %s232 = scalar_lea.sflag [#allocation3], %s223
        %p234 = scmp.lt.u32.totalorder 12, 8
        %p235 = pneg %p234
        // Predicated region
        $region74: #{conv_lerp_clamp.1} parent=72 // pred_check
          _
        $region75: #{conv_lerp_clamp.1} parent=72 // pred_check_branch
          %237 = sbr.rel (%p234) target = $region77
        $region76: #{conv_lerp_clamp.1} parent=72 // pred_region
          %s252 = sand.u32 12, 7
          %p253 = scmp.eq.s32.totalorder %s252, 0
          %p254 = pneg %p253
          // Predicated region
          $region89: #{conv_lerp_clamp.1} parent=76 // pred_check
            _
          $region90: #{conv_lerp_clamp.1} parent=76 // pred_check_branch
            %256 = sbr.rel (%p253) target = $region92
          $region91: #{conv_lerp_clamp.1} parent=76 // pred_region
            %s257 = sand.u32 12, 7
            %s258 = ssub.s32 12, %s257
            %s259 = scalar_lea.vmem %s228, %s258
            %s260 = ssub.s32 12, %s257
            %s261 = scalar_lea.vmem %s231, %s260 [#allocation2]
            loop: start=0, step=1, limit=1
            $region93: #{conv_lerp_clamp.1} parent=91 // loop_pre_header
              _
            $region94: #{conv_lerp_clamp.1} parent=91 // loop_header
              %s263 = sphi 0, %s267
              %p264 = scmp.ge.s32.totalorder %s263, 1
              %s268 = sphi %s228, %s228
              %s269 = sphi %s231, %s231
            $region95: #{conv_lerp_clamp.1} parent=91 // loop_header_branch
              %266 = sbr.rel (%p264) target = $region99
            $region96: #{conv_lerp_clamp.1} parent=91 // loop_body
              %v270 = vld [vmem:[%s268] sm:$0xff]
              %271 = vst [vmem:[%s269] sm:$0xff] %v270
            $region97: #{conv_lerp_clamp.1} parent=91 // loop_footer
              %s267 = sadd.s32 1, %s263
            $region98: #{conv_lerp_clamp.1} parent=91 // loop_footer_branch
              %262 = sbr.rel target = $region94
            $region99: #{conv_lerp_clamp.1} parent=91 // loop_exit
              _
            %s272 = sshllo.u32 0, %s257
            loop: start=0, step=1, limit=1
            $region100: #{conv_lerp_clamp.1} parent=91 // loop_pre_header
              _
            $region101: #{conv_lerp_clamp.1} parent=91 // loop_header
              %s274 = sphi 0, %s278
              %p275 = scmp.ge.s32.totalorder %s274, 1
              %s279 = sphi %s259, %s259
              %s280 = sphi %s261, %s261
            $region102: #{conv_lerp_clamp.1} parent=91 // loop_header_branch
              %277 = sbr.rel (%p275) target = $region106
            $region103: #{conv_lerp_clamp.1} parent=91 // loop_body
              %v281 = vld [vmem:[%s279] sm:%s272]
              %282 = vst [vmem:[%s280] sm:%s272] %v281
            $region104: #{conv_lerp_clamp.1} parent=91 // loop_footer
              %s278 = sadd.s32 1, %s274
            $region105: #{conv_lerp_clamp.1} parent=91 // loop_footer_branch
              %273 = sbr.rel target = $region101
            $region106: #{conv_lerp_clamp.1} parent=91 // loop_exit
              _
          $region92: #{conv_lerp_clamp.1} parent=76 // pred_fallthru
            _
        $region77: #{conv_lerp_clamp.1} parent=72 // pred_fallthru
          _
        // Predicated region
        $region78: #{conv_lerp_clamp.1} parent=72 // pred_check
          %p238 = pneg %p234
        $region79: #{conv_lerp_clamp.1} parent=72 // pred_check_branch
          %240 = sbr.rel (%p238) target = $region81
        $region80: #{conv_lerp_clamp.1} parent=72 // pred_region
          %s241 = sshllo.u32 0, 12
          loop: start=0, step=1, limit=1
          $region82: #{conv_lerp_clamp.1} parent=80 // loop_pre_header
            _
          $region83: #{conv_lerp_clamp.1} parent=80 // loop_header
            %s243 = sphi 0, %s247
            %p244 = scmp.ge.s32.totalorder %s243, 1
            %s248 = sphi %s228, %s228
            %s249 = sphi %s231, %s231
          $region84: #{conv_lerp_clamp.1} parent=80 // loop_header_branch
            %246 = sbr.rel (%p244) target = $region88
          $region85: #{conv_lerp_clamp.1} parent=80 // loop_body
            %v250 = vld [vmem:[%s248] sm:%s241]
            %251 = vst [vmem:[%s249] sm:%s241] %v250
          $region86: #{conv_lerp_clamp.1} parent=80 // loop_footer
            %s247 = sadd.s32 1, %s243
          $region87: #{conv_lerp_clamp.1} parent=80 // loop_footer_branch
            %242 = sbr.rel target = $region83
          $region88: #{conv_lerp_clamp.1} parent=80 // loop_exit
            _
        $region81: #{conv_lerp_clamp.1} parent=72 // pred_fallthru
          _
        // Predicated region
        $region107: #{conv_lerp_clamp.1} parent=72 // pred_check
          _
        $region108: #{conv_lerp_clamp.1} parent=72 // pred_check_branch
          %285 = sbr.rel (0) target = $region110
        $region109: #{conv_lerp_clamp.1} parent=72 // pred_region
          %286 = vsyncadd %s232, 192
        $region110: #{conv_lerp_clamp.1} parent=72 // pred_fallthru
          _
      $region73: #{conv_lerp_clamp.1} parent=27 // pred_fallthru
        _
      %v287 = vld [vmem:[%s211] sm:$0xff]
      %v288 = vld [vmem:[%s211] sm:$0xff]
      %v289 = vld [vmem:[%s211 + $0x8] sm:$0xf]
      %v291 = vcombine.high %v287, %v287
      %v295 = vcombine.low %v288, %v288
      %v296 = vcombine.low %v289, %v289
      %297 = vrot.lane.b32.xlu0 %v295, 127
      %v298 = vpop.permute.xlu0 %297
      %299 = vrot.lane.b32.xlu0 %v288, 127
      %v300 = vpop.permute.xlu0 %299
      %301 = vrot.lane.b32.xlu0 %v296, 127
      %v302 = vpop.permute.xlu0 %301
      %vm303 = vcmask 1039360
      %v304 = vsel %vm303, %v298, %v300
      %v305 = vsel %vm303, %v300, %v302
      %v308 = vcombine.high %v288, %v288
      %309 = vrot.lane.b32.xlu0 %v288, 126
      %v310 = vpop.permute.xlu0 %309
      %311 = vrot.lane.b32.xlu0 %v308, 126
      %v312 = vpop.permute.xlu0 %311
      %313 = vrot.lane.b32.xlu0 %v289, 126
      %v314 = vpop.permute.xlu0 %313
      %vm315 = vcmask 1031168
      %v316 = vsel %vm315, %v310, %v312
      %v317 = vsel %vm315, %v312, %v314
      %320 = vrot.lane.b32.xlu0 %v295, 125
      %v321 = vpop.permute.xlu0 %320
      %322 = vrot.lane.b32.xlu0 %v288, 125
      %v323 = vpop.permute.xlu0 %322
      %324 = vrot.lane.b32.xlu0 %v296, 125
      %v325 = vpop.permute.xlu0 %324
      %vm326 = vcmask 1022976
      %v327 = vsel %vm326, %v321, %v323
      %v328 = vsel %vm326, %v323, %v325
      %331 = vrot.lane.b32.xlu0 %v288, 124
      %v332 = vpop.permute.xlu0 %331
      %333 = vrot.lane.b32.xlu0 %v308, 124
      %v334 = vpop.permute.xlu0 %333
      %335 = vrot.lane.b32.xlu0 %v289, 124
      %v336 = vpop.permute.xlu0 %335
      %vm337 = vcmask 1014784
      %v338 = vsel %vm337, %v332, %v334
      %v339 = vsel %vm337, %v334, %v336
      %342 = vrot.lane.b32.xlu0 %v295, 108
      %v343 = vpop.permute.xlu0 %342
      %344 = vrot.lane.b32.xlu0 %v288, 108
      %v345 = vpop.permute.xlu0 %344
      %346 = vrot.lane.b32.xlu0 %v296, 108
      %v347 = vpop.permute.xlu0 %346
      %vm348 = vcmask 883712
      %v349 = vsel %vm348, %v343, %v345
      %v350 = vsel %vm348, %v345, %v347
      %353 = vrot.lane.b32.xlu0 %v288, 107
      %v354 = vpop.permute.xlu0 %353
      %355 = vrot.lane.b32.xlu0 %v308, 107
      %v356 = vpop.permute.xlu0 %355
      %357 = vrot.lane.b32.xlu0 %v289, 107
      %v358 = vpop.permute.xlu0 %357
      %vm359 = vcmask 875520
      %v360 = vsel %vm359, %v354, %v356
      %v361 = vsel %vm359, %v356, %v358
      %364 = vrot.lane.b32.xlu0 %v295, 106
      %v365 = vpop.permute.xlu0 %364
      %366 = vrot.lane.b32.xlu0 %v288, 106
      %v367 = vpop.permute.xlu0 %366
      %368 = vrot.lane.b32.xlu0 %v296, 106
      %v369 = vpop.permute.xlu0 %368
      %vm370 = vcmask 867328
      %v371 = vsel %vm370, %v365, %v367
      %v372 = vsel %vm370, %v367, %v369
      %375 = vrot.lane.b32.xlu0 %v288, 105
      %v376 = vpop.permute.xlu0 %375
      %377 = vrot.lane.b32.xlu0 %v308, 105
      %v378 = vpop.permute.xlu0 %377
      %379 = vrot.lane.b32.xlu0 %v289, 105
      %v380 = vpop.permute.xlu0 %379
      %vm381 = vcmask 859136
      %v382 = vsel %vm381, %v376, %v378
      %v383 = vsel %vm381, %v378, %v380
      %386 = vrot.lane.b32.xlu0 %v295, 104
      %v387 = vpop.permute.xlu0 %386
      %388 = vrot.lane.b32.xlu0 %v288, 104
      %v389 = vpop.permute.xlu0 %388
      %390 = vrot.lane.b32.xlu0 %v296, 104
      %v391 = vpop.permute.xlu0 %390
      %vm392 = vcmask 850944
      %v393 = vsel %vm392, %v387, %v389
      %v394 = vsel %vm392, %v389, %v391
      %397 = vrot.lane.b32.xlu0 %v288, 88
      %v398 = vpop.permute.xlu0 %397
      %399 = vrot.lane.b32.xlu0 %v308, 88
      %v400 = vpop.permute.xlu0 %399
      %401 = vrot.lane.b32.xlu0 %v289, 88
      %v402 = vpop.permute.xlu0 %401
      %vm403 = vcmask 719872
      %v404 = vsel %vm403, %v398, %v400
      %v405 = vsel %vm403, %v400, %v402
      %408 = vrot.lane.b32.xlu0 %v295, 87
      %v409 = vpop.permute.xlu0 %408
      %410 = vrot.lane.b32.xlu0 %v288, 87
      %v411 = vpop.permute.xlu0 %410
      %412 = vrot.lane.b32.xlu0 %v296, 87
      %v413 = vpop.permute.xlu0 %412
      %vm414 = vcmask 711680
      %v415 = vsel %vm414, %v409, %v411
      %v416 = vsel %vm414, %v411, %v413
      %419 = vrot.lane.b32.xlu0 %v288, 86
      %v420 = vpop.permute.xlu0 %419
      %421 = vrot.lane.b32.xlu0 %v308, 86
      %v422 = vpop.permute.xlu0 %421
      %423 = vrot.lane.b32.xlu0 %v289, 86
      %v424 = vpop.permute.xlu0 %423
      %vm425 = vcmask 703488
      %v426 = vsel %vm425, %v420, %v422
      %v427 = vsel %vm425, %v422, %v424
      %430 = vrot.lane.b32.xlu0 %v295, 85
      %v431 = vpop.permute.xlu0 %430
      %432 = vrot.lane.b32.xlu0 %v288, 85
      %v433 = vpop.permute.xlu0 %432
      %434 = vrot.lane.b32.xlu0 %v296, 85
      %v435 = vpop.permute.xlu0 %434
      %vm436 = vcmask 695296
      %v437 = vsel %vm436, %v431, %v433
      %v438 = vsel %vm436, %v433, %v435
      %441 = vrot.lane.b32.xlu0 %v288, 84
      %v442 = vpop.permute.xlu0 %441
      %443 = vrot.lane.b32.xlu0 %v308, 84
      %v444 = vpop.permute.xlu0 %443
      %445 = vrot.lane.b32.xlu0 %v289, 84
      %v446 = vpop.permute.xlu0 %445
      %vm447 = vcmask 687104
      %v448 = vsel %vm447, %v442, %v444
      %v449 = vsel %vm447, %v444, %v446
      %452 = vrot.lane.b32.xlu0 %v295, 68
      %v453 = vpop.permute.xlu0 %452
      %454 = vrot.lane.b32.xlu0 %v288, 68
      %v455 = vpop.permute.xlu0 %454
      %456 = vrot.lane.b32.xlu0 %v296, 68
      %v457 = vpop.permute.xlu0 %456
      %vm458 = vcmask 556032
      %v459 = vsel %vm458, %v453, %v455
      %v460 = vsel %vm458, %v455, %v457
      %vm463 = vcmask 1043456
      %v464 = vsel %vm463, %v287, %v304
      %v465 = vsel %vm463, %v291, %v305
      %v466 = vsel %vm463, %v316, %v327
      %v467 = vsel %vm463, %v317, %v328
      %v468 = vsel %vm463, %v338, %v349
      %v469 = vsel %vm463, %v339, %v350
      %v470 = vsel %vm463, %v360, %v371
      %v471 = vsel %vm463, %v361, %v372
      %v472 = vsel %vm463, %v382, %v393
      %v473 = vsel %vm463, %v383, %v394
      %v474 = vsel %vm463, %v404, %v415
      %v475 = vsel %vm463, %v405, %v416
      %v476 = vsel %vm463, %v426, %v437
      %v477 = vsel %vm463, %v427, %v438
      %v478 = vsel %vm463, %v448, %v459
      %v479 = vsel %vm463, %v449, %v460
      %484 = vrot.lane.b32.xlu0 %v288, 109
      %v485 = vpop.permute.xlu0 %484
      %486 = vrot.lane.b32.xlu0 %v308, 109
      %v487 = vpop.permute.xlu0 %486
      %488 = vrot.lane.b32.xlu0 %v289, 109
      %v489 = vpop.permute.xlu0 %488
      %vm490 = vcmask 891904
      %v491 = vsel %vm490, %v485, %v487
      %v492 = vsel %vm490, %v487, %v489
      %v499 = vsel %vm463, %v288, %v304
      %v500 = vsel %vm463, %v308, %v305
      %v501 = vsel %vm463, %v289, %v302
      %v502 = vsel %vm463, %v314, %v325
      %v503 = vsel %vm463, %v491, %v349
      %v504 = vsel %vm463, %v492, %v350
      %v505 = vsel %vm463, %v489, %v347
      %v506 = vsel %vm463, %v358, %v369
      %519 = vrot.lane.b32.xlu0 %v499, 67
      %v520 = vpop.permute.xlu0 %519
      %521 = vrot.lane.b32.xlu0 %v500, 67
      %v522 = vpop.permute.xlu0 %521
      %523 = vrot.lane.b32.xlu0 %v501, 67
      %v524 = vpop.permute.xlu0 %523
      %525 = vrot.lane.b32.xlu0 %v466, 67
      %v526 = vpop.permute.xlu0 %525
      %527 = vrot.lane.b32.xlu0 %v467, 67
      %v528 = vpop.permute.xlu0 %527
      %529 = vrot.lane.b32.xlu0 %v502, 67
      %v530 = vpop.permute.xlu0 %529
      %531 = vrot.lane.b32.xlu0 %v503, 67
      %v532 = vpop.permute.xlu0 %531
      %533 = vrot.lane.b32.xlu0 %v504, 67
      %v534 = vpop.permute.xlu0 %533
      %535 = vrot.lane.b32.xlu0 %v505, 67
      %v536 = vpop.permute.xlu0 %535
      %537 = vrot.lane.b32.xlu0 %v470, 67
      %v538 = vpop.permute.xlu0 %537
      %539 = vrot.lane.b32.xlu0 %v471, 67
      %v540 = vpop.permute.xlu0 %539
      %541 = vrot.lane.b32.xlu0 %v506, 67
      %v542 = vpop.permute.xlu0 %541
      %543 = vrot.lane.b32.xlu0 %v382, 67
      %v544 = vpop.permute.xlu0 %543
      %545 = vrot.lane.b32.xlu0 %v383, 67
      %v546 = vpop.permute.xlu0 %545
      %547 = vrot.lane.b32.xlu0 %v380, 67
      %v548 = vpop.permute.xlu0 %547
      %vm549 = vcmask 547840
      %v550 = vsel %vm549, %v520, %v522
      %v551 = vsel %vm549, %v522, %v524
      %v552 = vsel %vm549, %v526, %v528
      %v553 = vsel %vm549, %v528, %v530
      %v554 = vsel %vm549, %v532, %v534
      %v555 = vsel %vm549, %v534, %v536
      %v556 = vsel %vm549, %v538, %v540
      %v557 = vsel %vm549, %v540, %v542
      %v558 = vsel %vm549, %v544, %v546
      %v559 = vsel %vm549, %v546, %v548
      %v568 = vld [vmem:[%s1] sm:$0xf]
      %vm569 = vcmask 818176
      %v571 = vsel %vm569, %v568, 0
      %v573 = vsel %vm463, %v558, 0
      %v575 = vsel %vm463, %v559, 0
      %577 = vmatprep.subr.mxu0 %v465
      %578 = vmatpush1.msra.mxu0 %v464
      %579 = vmatprep.subr.mxu0 %v467
      %580 = vmatpush1.msra.mxu0 %v466
      %581 = vmatprep.subr.mxu0 %v469
      %582 = vmatpush1.msra.mxu0 %v468
      %583 = vmatprep.subr.mxu0 %v471
      %584 = vmatpush1.msra.mxu0 %v470
      %585 = vmatprep.subr.mxu0 %v473
      %586 = vmatpush1.msra.mxu0 %v472
      %587 = vmatprep.subr.mxu0 %v475
      %588 = vmatpush1.msra.mxu0 %v474
      %589 = vmatprep.subr.mxu0 %v477
      %590 = vmatpush1.msra.mxu0 %v476
      %591 = vmatprep.subr.mxu0 %v479
      %592 = vmatpush1.msra.mxu0 %v478
      %593 = vmatprep.subr.mxu0 %v551
      %594 = vmatpush1.msra.mxu0 %v550
      %595 = vmatprep.subr.mxu0 %v553
      %596 = vmatpush1.msra.mxu0 %v552
      %597 = vmatprep.subr.mxu0 %v555
      %598 = vmatpush1.msra.mxu0 %v554
      %599 = vmatprep.subr.mxu0 %v557
      %600 = vmatpush1.msra.mxu0 %v556
      %601 = vmatprep.subr.mxu0 %v575
      %602 = vmatpush1.msra.mxu0 %v573
      %603 = vmatprep.subr.mxu0 0.0
      %604 = vmatpush1.msra.mxu0 0.0
      %605 = vmatprep.subr.mxu0 0.0
      %606 = vmatpush1.msra.mxu0 0.0
      %607 = vmatprep.subr.mxu0 0.0
      %608 = vmatpush1.msra.mxu0 0.0
      %609 = vmatprep.subr.mxu0 0.0
      %610 = vmatpush1.msra.mxu0 0.0
      %611 = vmatprep.subr.mxu0 0.0
      %612 = vmatpush1.msra.mxu0 0.0
      %613 = vmatprep.subr.mxu0 0.0
      %614 = vmatpush1.msra.mxu0 0.0
      %615 = vmatprep.subr.mxu0 0.0
      %616 = vmatpush1.msra.mxu0 0.0
      %617 = vmatprep.subr.mxu0 0.0
      %618 = vmatpush1.msra.mxu0 0.0
      %619 = vmatprep.subr.mxu0 0.0
      %620 = vmatpush1.msra.mxu0 0.0
      %621 = vmatprep.subr.mxu0 0.0
      %622 = vmatpush1.msra.mxu0 0.0
      %623 = vmatprep.subr.mxu0 0.0
      %624 = vmatpush1.msra.mxu0 0.0
      %625 = vmatprep.subr.mxu0 0.0
      %626 = vmatpush1.msra.mxu0 0.0
      %627 = vmatprep.subr.mxu0 0.0
      %628 = vmatpush1.msra.mxu0 0.0
      %629 = vmatprep.subr.mxu0 0.0
      %630 = vmatpush1.msra.mxu0 0.0
      %631 = vmatprep.subr.mxu0 0.0
      %632 = vmatpush1.msra.mxu0 0.0
      %633 = vmatprep.subr.mxu0 0.0
      %634 = vmatpush1.msra.mxu0 0.0
      %635 = vmatprep.subr.mxu0 0.0
      %636 = vmatpush1.msra.mxu0 0.0
      %637 = vmatprep.subr.mxu0 0.0
      %638 = vmatpush1.msra.mxu0 0.0
      %639 = vmatprep.subr.mxu0 0.0
      %640 = vmatpush1.msra.mxu0 0.0
      %641 = vmatprep.mubr.f32.mxu0 0.0
      %642 = vmatmul.mubr.f32.gmra.mrb[0].mxu0 %v571
      %v643 = vpop.f32.mrb[0].mxu0
      %v644 = vadd.f32 0.0, %v643
      %v645 = vpop.f32.mrb[0].mxu0
      %v646 = vadd.f32 0.0, %v645
      %647 = vdwg.mxu0
      %s648 = sld [smem:[#allocation4]]
      %v649 = vsub.f32 %v644, %v426
      %v650 = vsub.f32 %v646, %v427
      %v651 = vstv %s648
      %v652 = vmul.f32 %v649, %v651
      %v653 = vmul.f32 %v650, %v651
      %v656 = vcombine.low %v652, %v653
      %657 = vrot.lane.b32.xlu0 %v656, 42
      %v658 = vpop.permute.xlu0 %657
      %v659 = vrot.slane %v658, 4
      %vm660 = vcmask 343040
      %v661 = vsel %vm660, %v659, %v658
      %v664 = vadd.f32 %v288, %v661
      %v665 = vadd.f32 %v289, %v659
      %v666 = vmax.f32 %v664, 0.0
      %v667 = vmax.f32 %v665, 0.0
      %v668 = vmin.f32 %v666, 1.0
      %v669 = vmin.f32 %v667, 1.0
      %672 = vrot.lane.b32.xlu0 %v668, 86
      %v673 = vpop.permute.xlu0 %672
      %674 = vrot.lane.b32.xlu0 %v669, 86
      %v675 = vpop.permute.xlu0 %674
      %v676 = vrot.slane %v673, 4
      %v677 = vrot.slane %v675, 4
      %v678 = vsel %vm463, %v676, %v677
      %v679 = vsel %vm425, %v673, %v678
      %681 = vst [vmem:[%s141] sm:$0xff] %v679
      %s682 = sadd.s32 %s19, %s20
      %s683 = smul.u32 2, %s682
      %p684 = scmp.lt.s32.totalorder %s683, 3
      %s685 = scalar_select %p684, %s683, 3
      %s686 = smul.addr %s685, 4
      %s687 = scalar_lea.vmem %s3, %s686
      // Predicated region
      $region111: #{conv_lerp_clamp.1} parent=27 // pred_check
        %p688 = pneg %p89
      $region112: #{conv_lerp_clamp.1} parent=27 // pred_check_branch
        %690 = sbr.rel (%p688) target = $region114
      $region113: #{conv_lerp_clamp.1} parent=27 // pred_region
        %s691 = sadd.s32 %s19, %s20
        %s692 = smul.u32 2, %s691
      $region114: #{conv_lerp_clamp.1} parent=27 // pred_fallthru
        _
    $region28: #{conv_lerp_clamp.1} parent=5 // pred_fallthru
      _
    %p693 = scmp.le.s32.totalorder 2, %s10
    // Predicated region
    $region115: #{conv_lerp_clamp.1} parent=5 // pred_check
      %p694 = pneg %p693
    $region116: #{conv_lerp_clamp.1} parent=5 // pred_check_branch
      %696 = sbr.rel (%p694) target = $region118
    $region117: #{conv_lerp_clamp.1} parent=5 // pred_region
      %s697 = ssub.s32 %s10, 2
      // Predicated region
      $region119: #{conv_lerp_clamp.1} parent=117 // pred_check
        %p698 = pneg %p95
      $region120: #{conv_lerp_clamp.1} parent=117 // pred_check_branch
        %700 = sbr.rel (%p698) target = $region122
      $region121: #{conv_lerp_clamp.1} parent=117 // pred_region
        %s701 = sadd.s32 %s21, %s22
        %s702 = smul.u32 2, %s701
        %p703 = scmp.lt.s32.totalorder %s702, 3
        %s704 = scalar_select %p703, %s702, 3
        %s705 = smul.addr %s704, 4
        %s706 = scalar_lea.vmem %s3, %s705
      $region122: #{conv_lerp_clamp.1} parent=117 // pred_fallthru
        _
    $region118: #{conv_lerp_clamp.1} parent=5 // pred_fallthru
      _
  $region6: #{conv_lerp_clamp.1} parent=0 // loop_footer
    %s14 = sadd.s32 1, %s10
  $region7: #{conv_lerp_clamp.1} parent=0 // loop_footer_branch
    %9 = sbr.rel target = $region3
  $region8: #{conv_lerp_clamp.1} parent=0 // loop_exit
    _
  %707 = vsyncmov [#allocation3]
  %s708 = vpop.sfrf %707
  %p709 = scmp.eq.s32.totalorder %s708, 0
  %p710 = pneg %p709
  %712 = shalt.err (%p710)
  %s713 = scalar_lea.sflag [#allocation3], 1
  %714 = vsyncmov %s713
  %s715 = vpop.sfrf %714
  %p716 = scmp.eq.s32.totalorder %s715, 0
  %p717 = pneg %p716
  %719 = shalt.err (%p717)

</llo_original>
